<compile_context>
chip_gen: v7x
topology: tpu7x:2x2x1
jax: 0.10.0
libtpu: 0.0.40
codegen_flags: <defaults>
</compile_context>

<pallas_src>
import functools
import math

import jax
import jax.numpy as jnp
from jax.experimental import pallas as pl
from jax.experimental.pallas import tpu as pltpu

_LANES = 128
_SUBLANES = 8

# Compute-chunk size used inside the fused (whole-tensor-resident) kernel to
# bound VMEM temporaries and break long serial accumulation chains.
_FUSED_CHUNK_ROWS = 1024                      # 512 KiB per f32 chunk

_TWO_PASS_VMEM_LIMIT = 32 * 1024 * 1024


@functools.lru_cache(maxsize=None)
def _chip_config():
    """Per-generation tuning: (fused_max_bytes, tile_rows, fused_vmem_limit)."""
    try:
        vmem_cap = int(pltpu.get_tpu_info().vmem_capacity_bytes)
    except Exception:                          # conservative fallback
        vmem_cap = 64 * 1024 * 1024
    if vmem_cap >= 96 * 1024 * 1024:
        # v5e / v6e: 128 MiB VMEM, single TensorCore.  The fused 2N-byte path
        # wins whenever it fits: raise the threshold to 16 MiB (worst case
        # 2x in + 2x out double-buffered = 64 MiB + chunk temps < 96 MiB) and
        # the scoped-VMEM budget for that single call.
        # TODO(synk): with pipeline_mode=pl.Buffered(1) support this could go
        # to ~24-32 MiB; kept double-buffer-safe here.
        return 16 * 1024 * 1024, 2048, 96 * 1024 * 1024
    # v7x-like: 64 MiB VMEM/TC but TWO TensorCores.  grid=(1,) pins the fused
    # kernel to one TC, so above a few MiB the two-pass "parallel" path (both
    # TCs, ~2x aggregate HBM BW) wins; keep the fused threshold small and use
    # 2 MiB (4096x128 f32) blocks for the two-pass kernels.
    return 4 * 1024 * 1024, 4096, 48 * 1024 * 1024


# ---------------------------------------------------------------------------
# Fused kernel (whole tensor resident in VMEM): reduce + quantize in one pass
# ---------------------------------------------------------------------------
def _fused_lsq_kernel(x_ref, o_ref, step_ref, *, qp, numel, sqrt_qp, chunks):
    # Pass A: chunked |x| accumulation (bounds VMEM temporaries & f32 error).
    total = jnp.float32(0.0)
    for start, nrows in chunks:
        xa = jnp.abs(x_ref[pl.ds(start, nrows), :].astype(jnp.float32))
        if nrows % _SUBLANES == 0:
            part = xa.reshape(nrows // _SUBLANES, _SUBLANES, _LANES).sum(axis=0)
            total = total + jnp.sum(part)
        else:
            total = total + jnp.sum(xa)

    s = total * jnp.float32(2.0 / (numel * sqrt_qp))
    step_ref[0, 0] = s
    # NOTE: an all-zero input gives step == 0 -> NaN, matching the naive
    # PyTorch module behavior.
    inv_s = 1.0 / s                            # exact scalar divide, once

    # Pass B: chunked quantize, output written in the input dtype.
    for start, nrows in chunks:
        x = x_ref[pl.ds(start, nrows), :].astype(jnp.float32)
        v_bar = jnp.clip(jnp.round(x * inv_s), 0.0, float(qp))
        o_ref[pl.ds(start, nrows), :] = (v_bar * s).astype(o_ref.dtype)


# ---------------------------------------------------------------------------
# Two-pass kernels (large tensors)
# ---------------------------------------------------------------------------
def _abs_sum_kernel(x_ref, psum_ref, *, rows, tile_rows, total_blocks,
                    need_mask):
    xa = jnp.abs(x_ref[...].astype(jnp.float32))
    n_groups = tile_rows // _SUBLANES

    def _reduce(v):
        # VPU partial accumulation down to one (8,128) slab, then a single
        # cross-lane/sublane XLU reduce per block.
        return jnp.sum(v.reshape(n_groups, _SUBLANES, _LANES).sum(axis=0))

    if need_mask:
        blk = pl.program_id(0)
        is_last = blk == total_blocks - 1

        # Only the final (partial) block holds garbage rows; gate the
        # iota/compare/select there so the common path stays DMA-bound.
        @pl.when(is_last)
        def _masked():
            row0 = blk * tile_rows
            ridx = (jax.lax.broadcasted_iota(jnp.int32, (tile_rows, _LANES), 0)
                    + row0)
            psum_ref[0, 0] = _reduce(jnp.where(ridx < rows, xa,
                                               jnp.float32(0.0)))

        @pl.when(jnp.logical_not(is_last))
        def _plain():
            psum_ref[0, 0] = _reduce(xa)
    else:
        psum_ref[0, 0] = _reduce(xa)


def _quantize_kernel(scale_ref, x_ref, o_ref, *, qp):
    s = scale_ref[0, 0]
    inv_s = scale_ref[0, 1]                    # precomputed 1/step (wrapper)
    x = x_ref[...].astype(jnp.float32)
    v_bar = jnp.clip(jnp.round(x * inv_s), 0.0, float(qp))
    o_ref[...] = (v_bar * s).astype(o_ref.dtype)


# ---------------------------------------------------------------------------
# Wrapper
# ---------------------------------------------------------------------------
def act_lsq_forward(x, nbits=3, fused_max_bytes=None, tile_rows=None):
    """Forward pass of ActLSQ (fresh module: step_size initialized from x).

    Returns (x_q, step_size).  x_q has the same dtype as x; step_size is f32.
    """
    if not jnp.issubdtype(x.dtype, jnp.floating):
        x = x.astype(jnp.float32)
    dtype = x.dtype
    itemsize = jnp.dtype(dtype).itemsize
    orig_shape = x.shape
    numel = int(x.size)
    qp = 2 ** nbits - 1
    sqrt_qp = math.sqrt(qp)

    cfg_fused_max, cfg_tile_rows, fused_vmem_limit = _chip_config()
    if fused_max_bytes is None:
        fused_max_bytes = cfg_fused_max
    if tile_rows is None:
        tile_rows = cfg_tile_rows

    pad = (-numel) % _LANES
    if pad:
        # TODO(synk): ragged tail (numel % 128 != 0) still takes a padded copy;
        # conv activations essentially never hit this path.
        flat = jnp.concatenate([x.reshape(-1), jnp.zeros((pad,), dtype)])
    else:
        flat = x.reshape(-1)                   # free (metadata-only) reshape
    x2d = flat.reshape(-1, _LANES)
    rows = x2d.shape[0]
    padded_bytes = rows * _LANES * itemsize

    use_fused = (padded_bytes <= fused_max_bytes) or (rows < tile_rows)

    if use_fused:
        # Single pass: one HBM read, one HBM write (2N bytes total).
        chunks = tuple((s, min(_FUSED_CHUNK_ROWS, rows - s))
                       for s in range(0, rows, _FUSED_CHUNK_ROWS))
        out2d, step2d = pl.pallas_call(
            functools.partial(_fused_lsq_kernel, qp=qp, numel=numel,
                              sqrt_qp=sqrt_qp, chunks=chunks),
            out_shape=(jax.ShapeDtypeStruct((rows, _LANES), dtype),
                       jax.ShapeDtypeStruct((1, 1), jnp.float32)),
            grid_spec=pltpu.PrefetchScalarGridSpec(
                num_scalar_prefetch=0,
                grid=(1,),
                in_specs=[pl.BlockSpec((rows, _LANES), lambda i: (0, 0))],
                out_specs=(pl.BlockSpec((rows, _LANES), lambda i: (0, 0)),
                           pl.BlockSpec((1, 1), lambda i: (0, 0),
                                        memory_space=pltpu.SMEM)),
            ),
            compiler_params=pltpu.CompilerParams(
                dimension_semantics=("arbitrary",),
                vmem_limit_bytes=fused_vmem_limit),
        )(x2d)
        step_size = step2d[0, 0]
    else:
        total_blocks = pl.cdiv(rows, tile_rows)
        need_mask = (rows % tile_rows) != 0

        # ---- pass 1: per-block |x| partial sums --------------------------
        # Pure "parallel" 1-D grid (both v7x TCs for ANY block count); the
        # tiny (total_blocks, 1) partial-sum vector is reduced in the wrapper.
        psum = pl.pallas_call(
            functools.partial(_abs_sum_kernel, rows=rows, tile_rows=tile_rows,
                              total_blocks=total_blocks, need_mask=need_mask),
            out_shape=jax.ShapeDtypeStruct((total_blocks, 1), jnp.float32),
            grid_spec=pltpu.PrefetchScalarGridSpec(
                num_scalar_prefetch=0,
                grid=(total_blocks,),
                in_specs=[pl.BlockSpec((tile_rows, _LANES),
                                       lambda i: (i, 0))],
                out_specs=pl.BlockSpec((1, 1), lambda i: (i, 0),
                                       memory_space=pltpu.SMEM),
            ),
            compiler_params=pltpu.CompilerParams(
                dimension_semantics=("parallel",),
                vmem_limit_bytes=_TWO_PASS_VMEM_LIMIT),
        )(x2d)

        abs_total = jnp.sum(psum)
        step_size = abs_total * jnp.float32(2.0 / (numel * sqrt_qp))
        inv_step = 1.0 / step_size             # NaN for all-zero input (as torch)
        scale2d = jnp.stack([step_size, inv_step]).reshape(1, 2).astype(
            jnp.float32)

        # ---- pass 2: elementwise quantize --------------------------------
        out2d = pl.pallas_call(
            functools.partial(_quantize_kernel, qp=qp),
            out_shape=jax.ShapeDtypeStruct((rows, _LANES), dtype),
            grid_spec=pltpu.PrefetchScalarGridSpec(
                num_scalar_prefetch=0,
                grid=(total_blocks,),
                in_specs=[
                    pl.BlockSpec((1, 2), lambda i: (0, 0),
                                 memory_space=pltpu.SMEM),
                    pl.BlockSpec((tile_rows, _LANES), lambda i: (i, 0)),
                ],
                out_specs=pl.BlockSpec((tile_rows, _LANES), lambda i: (i, 0)),
            ),
            compiler_params=pltpu.CompilerParams(
                dimension_semantics=("parallel",),
                vmem_limit_bytes=_TWO_PASS_VMEM_LIMIT),
        )(scale2d, x2d)

    if pad:
        out = out2d.reshape(-1)[:numel].reshape(orig_shape)
    else:
        out = out2d.reshape(orig_shape)        # free (metadata-only) reshape
    return out, step_size


# ---------------------------------------------------------------------------
# Pure-JAX references (PyTorch forward semantics)
# ---------------------------------------------------------------------------
def _reference_step(x, nbits=3):
    qp = 2 ** nbits - 1
    return 2.0 * jnp.mean(jnp.abs(x.astype(jnp.float32))) / math.sqrt(qp)


if __name__ == "__main__":
    key = jax.random.PRNGKey(0)
    k1, k2, k3 = jax.random.split(key, 3)
    nbits = 3
    qp = 2 ** nbits - 1

    # --- small NCHW activation: fused single-pass (whole tensor in VMEM) ----
    x_small = jax.random.normal(k1, (2, 4, 16, 16), dtype=jnp.float32)
    y_small, step_small = act_lsq_forward(x_small, nbits=nbits)
    y_small = jax.block_until_ready(y_small)

    assert y_small.shape == x_small.shape and y_small.dtype == jnp.float32
    assert jnp.allclose(step_small, _reference_step(x_small, nbits), rtol=1e-4)
    # Elementwise check against the LSQ formula evaluated with the kernel's
    # own step (avoids spurious quantization-boundary flips caused purely by
    # reduction-order rounding differences in the mean).
    ref_small = jnp.clip(jnp.round(x_small * (1.0 / step_small)), 0.0,
                         float(qp)) * step_small
    assert jnp.allclose(y_small, ref_small, atol=1e-5, rtol=1e-5)

    # --- force the tiled two-pass path (split reduction + tiled quantize),
    # including the masked ragged last block, with a small test tensor -------
    x_big = jax.random.normal(k2, (4, 8, 33, 96), dtype=jnp.float32)
    y_big, step_big = act_lsq_forward(x_big, nbits=nbits,
                                      fused_max_bytes=0, tile_rows=256)
    y_big = jax.block_until_ready(y_big)

    assert jnp.allclose(step_big, _reference_step(x_big, nbits), rtol=1e-4)
    ref_big = jnp.clip(jnp.round(x_big * (1.0 / step_big)), 0.0,
                       float(qp)) * step_big
    assert jnp.allclose(y_big, ref_big, atol=1e-5, rtol=1e-5)

    # --- native bf16 input: no wrapper-side f32 upcast, bf16 output ---------
    x_bf16 = jax.random.normal(k3, (2, 4, 16, 16), dtype=jnp.bfloat16)
    y_bf16, step_bf16 = act_lsq_forward(x_bf16, nbits=nbits)
    y_bf16 = jax.block_until_ready(y_bf16)

    assert y_bf16.dtype == jnp.bfloat16
    assert jnp.allclose(step_bf16, _reference_step(x_bf16, nbits), rtol=1e-3)
    xb32 = x_bf16.astype(jnp.float32)
    ref_bf16 = (jnp.clip(jnp.round(xb32 * (1.0 / step_bf16)), 0.0, float(qp))
                * step_bf16).astype(jnp.bfloat16)
    assert jnp.allclose(y_bf16.astype(jnp.float32),
                        ref_bf16.astype(jnp.float32), atol=1e-2, rtol=1e-2)

    print("KERNEL_OK")
</pallas_src>

<mosaic_0001>
module attributes {stable_mosaic.version = 11 : i64} {
  func.func @_fused_lsq_kernel(%arg0: i32, %arg1: memref<16x128xf32, #tpu.memory_space<vmem>>, %arg2: memref<16x128xf32, #tpu.memory_space<vmem>>, %arg3: memref<1x1xf32, #tpu.memory_space<smem>>) attributes {dimension_semantics = [#tpu.dimension_semantics<arbitrary>], iteration_bounds = array<i64: 1>, scalar_prefetch = 0 : i64, scratch_operands = 0 : i64, tpu.core_type = #tpu.core_type<tc>, window_params = [{pipeline_mode = #tpu.pipeline_mode<synchronous>, transform_indices = @transform_0, window_bounds = array<i64: 16, 128>}, {pipeline_mode = #tpu.pipeline_mode<synchronous>, transform_indices = @transform_1, window_bounds = array<i64: 16, 128>}, {transform_indices = @transform_2, window_bounds = array<i64: 1, 1>}]} {
    %c0 = arith.constant 0 : index
    %c0_0 = arith.constant 0 : index
    %0 = vector.load %arg1[%c0, %c0_0] : memref<16x128xf32, #tpu.memory_space<vmem>>, vector<16x128xf32>
    %1 = math.absf %0 : vector<16x128xf32>
    %2 = vector.shape_cast %1 : vector<16x128xf32> to vector<2x8x128xf32>
    %cst = arith.constant dense<0.000000e+00> : vector<8x128xf32>
    %3 = vector.multi_reduction <add>, %2, %cst [0] : vector<2x8x128xf32> to vector<8x128xf32>
    %4 = vector.shape_cast %3 : vector<8x128xf32> to vector<1x8x128xf32>
    %cst_1 = arith.constant dense<0.000000e+00> : vector<1xf32>
    %5 = vector.multi_reduction <add>, %4, %cst_1 [1, 2] : vector<1x8x128xf32> to vector<1xf32>
    %6 = vector.shape_cast %5 : vector<1xf32> to vector<1x1x1xf32>
    %7 = vector.extract %6[0, 0, 0] : f32 from vector<1x1x1xf32>
    %cst_2 = arith.constant 0.000000e+00 : f32
    %8 = arith.addf %cst_2, %7 : f32
    %cst_3 = arith.constant 3.69105925E-4 : f32
    %9 = arith.mulf %8, %cst_3 : f32
    %c0_4 = arith.constant 0 : index
    %c0_5 = arith.constant 0 : index
    %10 = memref.load %arg3[%c0_4, %c0_5] : memref<1x1xf32, #tpu.memory_space<smem>>
    memref.store %9, %arg3[%c0_4, %c0_5] : memref<1x1xf32, #tpu.memory_space<smem>>
    %cst_6 = arith.constant 1.000000e+00 : f32
    %11 = arith.divf %cst_6, %9 : f32
    %c0_7 = arith.constant 0 : index
    %c0_8 = arith.constant 0 : index
    %12 = vector.load %arg1[%c0_7, %c0_8] : memref<16x128xf32, #tpu.memory_space<vmem>>, vector<16x128xf32>
    %13 = vector.broadcast %11 : f32 to vector<16x128xf32>
    %14 = arith.mulf %12, %13 : vector<16x128xf32>
    %15 = math.roundeven %14 : vector<16x128xf32>
    %cst_9 = arith.constant 0.000000e+00 : f32
    %cst_10 = arith.constant 7.000000e+00 : f32
    %16 = vector.broadcast %cst_9 : f32 to vector<16x128xf32>
    %17 = arith.maximumf %16, %15 : vector<16x128xf32>
    %18 = vector.broadcast %cst_10 : f32 to vector<16x128xf32>
    %19 = arith.minimumf %18, %17 : vector<16x128xf32>
    %20 = vector.broadcast %9 : f32 to vector<16x128xf32>
    %21 = arith.mulf %19, %20 : vector<16x128xf32>
    %c0_11 = arith.constant 0 : index
    %c0_12 = arith.constant 0 : index
    %22 = vector.load %arg2[%c0_11, %c0_12] : memref<16x128xf32, #tpu.memory_space<vmem>>, vector<16x128xf32>
    tpu.vector_store %arg2[%c0_11, %c0_12], %21 {strides = array<i32>} : memref<16x128xf32, #tpu.memory_space<vmem>>, vector<16x128xf32>,
    return
  }
  func.func @transform_0(%arg0: i32) -> (i32, i32) {
    %c0_i32 = arith.constant 0 : i32
    %c0_i32_0 = arith.constant 0 : i32
    %c0_i32_1 = arith.constant 0 : i32
    return %c0_i32, %c0_i32_0 : i32, i32
  }
  func.func @transform_1(%arg0: i32) -> (i32, i32) {
    %c0_i32 = arith.constant 0 : i32
    %c0_i32_0 = arith.constant 0 : i32
    %c0_i32_1 = arith.constant 0 : i32
    return %c0_i32, %c0_i32_0 : i32, i32
  }
  func.func @transform_2(%arg0: i32) -> (i32, i32) {
    %c0_i32 = arith.constant 0 : i32
    %c0_i32_0 = arith.constant 0 : i32
    %c0_i32_1 = arith.constant 0 : i32
    return %c0_i32, %c0_i32_0 : i32, i32
  }
}

</mosaic_0001>

<llo_original>
// kernel: tpu_custom_call.1
$region0: #{tpu_custom_call.1}
  #allocation0 [shape = 'u32[]', space=smem, size = 0x4, offset = 0x4, fixed_abs, tag = 'smem constant byte address 0x4 - core index']
  #allocation1 [shape = 'u32[144,128]{1,0:T(1,128)}', space=vmem, size = 0x12000, scoped, tag = 'internal scratch']
  %s0 = inlined_call_operand.hbm [shape: f32[16,128], index: 0, kind: input, shape index: {}]
  %s1 = inlined_call_operand.hbm [shape: f32[16,128], index: 1, kind: output, shape index: {0}]
  %s2 = inlined_call_operand.hbm [shape: f32[1,1], index: 2, kind: output, shape index: {1}]
  %3 = xla_tuple %s1, %s2
  %s4 = sld [smem:[#allocation0]]
  $region26: #{tpu_custom_call.1} parent=0
    _
  %s6 = ssub.s32 1, %s4
  %s7 = scalar_select 0, %s6, %s4
  $region1: #{tpu_custom_call.1} parent=0
    #allocation2 [shape = 'u8[8192]{0}', space=vmem, size = 0x2000, scoped, tag = 'input window, operand 0, single buffered']
    #allocation3 [shape = 's32[1]{0}', space=sflag, size = 0x4, scoped, tag = 'scoped memory for tpu_custom_call.1']
    #allocation4 [shape = 's32[1]{0}', space=sflag, size = 0x4, scoped, tag = 'scoped memory for tpu_custom_call.1']
    #allocation5 [shape = 's32[1]{0}', space=sflag, size = 0x4, scoped, tag = 'scoped memory for tpu_custom_call.1']
    #allocation6 [shape = 'u8[8192]{0}', space=vmem, size = 0x2000, scoped, tag = 'output window, operand 0, single buffered']
    #allocation7 [shape = 'u8[512]{0}', space=smem, size = 0x200, scoped, tag = 'output window, operand 1, single buffered']
    %8 = vsyncpa [#allocation3], 0
    %9 = vsyncpa [#allocation4], 0
    %10 = vsyncpa [#allocation5], 0
    // Predicated region
    $region2: #{tpu_custom_call.1} parent=1 // pred_check
      _
    $region3: #{tpu_custom_call.1} parent=1 // pred_check_branch
      %12 = sbr.rel (0) target = $region5
    $region4: #{tpu_custom_call.1} parent=1 // pred_region
      %s14 = ssub.s32 256, 256
      %15 = vsyncadd [#allocation3], %s14
      %s16 = sshll.u32 [#allocation2], 4
      %s17 = int_to_ptr.vmem [resolvable:$true] %s16
      %22 = dma.hbm_to_vmem [thread:$0]  %s0, 256, %s17, [#allocation3], 128, 128, 8
    $region5: #{tpu_custom_call.1} parent=1 // pred_fallthru
      _
    // Predicated region
    $region6: #{tpu_custom_call.1} parent=1 // pred_check
      _
    $region7: #{tpu_custom_call.1} parent=1 // pred_check_branch
      %24 = sbr.rel (0) target = $region9
    $region8: #{tpu_custom_call.1} parent=1 // pred_region
      %25 = dma.done [#allocation3], 256
    $region9: #{tpu_custom_call.1} parent=1 // pred_fallthru
      _
    %v26 = vld [vmem:[#allocation2] sm:$0xff]
    %v27 = vld [vmem:[#allocation2 + $0x8] sm:$0xff]
    %v28 = vand.u32 2147483647, %v26
    %v29 = vand.u32 2147483647, %v27
    %v30 = vadd.f32 %v28, %v29
    %31 = vadd.xlane.f32.xlu0 %v30
    %v32 = vpop.xlane.xlu0 %31
    %v33 = vrot.slane %v32, 4
    %v34 = vadd.f32 %v32, %v33
    %v35 = vrot.slane %v34, 2
    %v36 = vadd.f32 %v34, %v35
    %v37 = vrot.slane %v36, 1
    %v38 = vadd.f32 %v36, %v37
    %s39 = vtos %v38
    %s40 = sadd.f32 %s39, 0.0
    %s41 = smul.f32 %s40, 0.00036910592
    %s42 = scalar_lea.smem [#allocation7], 0
    %43 = sst [smem:[%s42]] %s41
    %v44 = vstv %s41
    %v45 = vrcp.pop %v44
    %s46 = vtos %v45
    %v47 = vld [vmem:[#allocation2] sm:$0xff]
    %v48 = vld [vmem:[#allocation2 + $0x8] sm:$0xff]
    %v49 = vstv %s46
    %v50 = vmul.f32 %v47, %v49
    %v51 = vmul.f32 %v48, %v49
    %v52 = vround.ne.pseudo %v50
    %v53 = vround.ne.pseudo %v51
    %v54 = vmax.f32 %v52, 0.0
    %v55 = vmax.f32 %v53, 0.0
    %v56 = vmin.f32 %v54, 7.0
    %v57 = vmin.f32 %v55, 7.0
    %v58 = vstv %s41
    %v59 = vmul.f32 %v56, %v58
    %v60 = vmul.f32 %v57, %v58
    %61 = vst [vmem:[#allocation6] sm:$0xff] %v59
    %62 = vst [vmem:[#allocation6 + $0x8] sm:$0xff] %v60
    // Predicated region
    $region10: #{tpu_custom_call.1} parent=1 // pred_check
      _
    $region11: #{tpu_custom_call.1} parent=1 // pred_check_branch
      %64 = sbr.rel (0) target = $region13
    $region12: #{tpu_custom_call.1} parent=1 // pred_region
      %s66 = ssub.s32 256, 256
      %67 = vsyncadd [#allocation4], %s66
      %s68 = sshll.u32 [#allocation6], 4
      %s69 = int_to_ptr.vmem [resolvable:$true] %s68
      %74 = dma.vmem_to_hbm [thread:$0]  %s69, 256, %s1, [#allocation4], 128, 128, 8
    $region13: #{tpu_custom_call.1} parent=1 // pred_fallthru
      _
    // Predicated region
    $region14: #{tpu_custom_call.1} parent=1 // pred_check
      _
    $region15: #{tpu_custom_call.1} parent=1 // pred_check_branch
      %76 = sbr.rel (0) target = $region17
    $region16: #{tpu_custom_call.1} parent=1 // pred_region
      %s78 = ssub.s32 16, 16
      %79 = vsyncadd [#allocation5], %s78
      %82 = dma.smem_to_hbm [#allocation7], 16, %s2, [#allocation5]
    $region17: #{tpu_custom_call.1} parent=1 // pred_fallthru
      _
    // Predicated region
    $region18: #{tpu_custom_call.1} parent=1 // pred_check
      _
    $region19: #{tpu_custom_call.1} parent=1 // pred_check_branch
      %84 = sbr.rel (0) target = $region21
    $region20: #{tpu_custom_call.1} parent=1 // pred_region
      %85 = dma.done [#allocation4], 256
    $region21: #{tpu_custom_call.1} parent=1 // pred_fallthru
      _
    // Predicated region
    $region22: #{tpu_custom_call.1} parent=1 // pred_check
      _
    $region23: #{tpu_custom_call.1} parent=1 // pred_check_branch
      %87 = sbr.rel (0) target = $region25
    $region24: #{tpu_custom_call.1} parent=1 // pred_region
      %88 = dma.done [#allocation5], 16
    $region25: #{tpu_custom_call.1} parent=1 // pred_fallthru
      _
    %89 = sfence
    %90 = vsyncpa [#allocation3], 1
    %91 = vsyncpa [#allocation4], 1
    %92 = vsyncpa [#allocation5], 1

</llo_original>
